<compile_context>
chip_gen: v7x
topology: tpu7x:2x2x1
jax: 0.10.0
libtpu: 0.0.40
codegen_flags: <defaults>
</compile_context>

<pallas_src>
import jax
import jax.numpy as jnp
from jax.experimental import pallas as pl
from jax.experimental.pallas import tpu as pltpu


def _double_conv_kernel(x_ref, t1_ref, b1_ref, t2_ref, b2_ref, o_ref):
    """Fused 3x3 conv -> ReLU -> 3x3 conv -> ReLU for one image.

    x_ref : (H, W*Cin)           bf16 input rows (one image), lane axis = W*Cin
    t1_ref: (3, W*Cin, W*Cout)   bf16 block-Toeplitz weights for conv1
    b1_ref: (1, W*Cout)          f32 bias tiled over W, conv1
    t2_ref: (3, W*Cout, W*Cout)  bf16 block-Toeplitz weights for conv2
    b2_ref: (1, W*Cout)          f32 bias tiled over W, conv2
    o_ref : (H, W*Cout)          f32 output rows (one image), lane-dense
    """
    f32 = jnp.float32
    x = x_ref[...]                                             # (H, W*Cin)

    def row_conv(inp, t_ref, b_ref):
        # One 3x3 conv (padding=1) in row layout: three MXU matmuls, one per
        # kernel row dy. dx taps + width zero-padding are baked into t_ref.
        p0 = jnp.dot(inp, t_ref[0], preferred_element_type=f32)   # needs row h-1
        p1 = jnp.dot(inp, t_ref[1], preferred_element_type=f32)   # needs row h
        p2 = jnp.dot(inp, t_ref[2], preferred_element_type=f32)   # needs row h+1
        zero_row = jnp.zeros((1, p0.shape[1]), f32)
        # Height zero-padding: shift the partial results by one row (zero fill)
        # instead of building a padded scratch buffer.
        shifted_dn = jnp.concatenate([zero_row, p0[:-1]], axis=0)  # out[h]+=P0[h-1]
        shifted_up = jnp.concatenate([p2[1:], zero_row], axis=0)   # out[h]+=P2[h+1]
        acc = p1 + shifted_dn + shifted_up + b_ref[...]            # f32
        return jnp.maximum(acc, 0.0)                               # f32 ReLU (VPU)

    act1 = row_conv(x, t1_ref, b1_ref)                         # (H, W*Cout) f32
    act2 = row_conv(act1.astype(t2_ref.dtype), t2_ref, b2_ref) # bf16 operands
    o_ref[...] = act2.astype(o_ref.dtype)                      # full-width store


def _block_toeplitz(w_oihw, width, dtype):
    """PyTorch OIHW (Cout, Cin, 3, 3) -> (3, width*Cin, width*Cout).

    T[dy, w_in*Cin + ci, w_out*Cout + co] = w[co, ci, dy, dx] with
    dx = w_in - w_out + 1 when 0 <= dx < 3, else 0. Out-of-range dx taps are
    dropped, which implements padding=1 along the width direction.
    """
    cout, cin, kh, kw = w_oihw.shape
    w_hwio = jnp.transpose(w_oihw, (2, 3, 1, 0)).astype(jnp.float32)  # (3,3,Cin,Cout)
    # shift[dx, w_in, w_out] = 1  iff  w_in == w_out + dx - 1
    shift = jnp.stack(
        [jnp.eye(width, k=1 - dx, dtype=jnp.float32) for dx in range(kw)])
    t = jnp.einsum("dpq,kdio->kpiqo", shift, w_hwio)  # (3, width, Cin, width, Cout)
    return t.reshape(kh, width * cin, width * cout).astype(dtype)


def double_conv(x_nchw, w1, b1, w2, b2, *, compute_dtype=jnp.bfloat16):
    """DoubleConv forward. x_nchw: (N, Cin, H, W); weights in PyTorch OIHW."""
    N, Cin, H, W = x_nchw.shape
    Cout = w1.shape[0]
    WCin, WCout = W * Cin, W * Cout

    # Layout glue (plain JAX; no padding round trip through HBM):
    # NCHW -> NHWC -> (N, H, W*Cin) rows; channels*width on the lane axis.
    x_rows = jnp.transpose(x_nchw, (0, 2, 3, 1)).reshape(N, H, WCin)
    x_rows = x_rows.astype(compute_dtype)

    t1 = _block_toeplitz(w1, W, compute_dtype)       # (3, W*Cin,  W*Cout)
    t2 = _block_toeplitz(w2, W, compute_dtype)       # (3, W*Cout, W*Cout)
    b1_row = jnp.tile(b1.astype(jnp.float32), W).reshape(1, WCout)
    b2_row = jnp.tile(b2.astype(jnp.float32), W).reshape(1, WCout)

    isz = jnp.dtype(compute_dtype).itemsize
    cost = pl.CostEstimate(
        flops=2 * N * H * W * 9 * (Cin * Cout + Cout * Cout),
        transcendentals=0,
        bytes_accessed=(x_rows.size * isz + t1.size * isz + t2.size * isz
                        + (b1_row.size + b2_row.size) * 4
                        + N * H * WCout * 4),
    )

    out_rows = pl.pallas_call(
        _double_conv_kernel,
        out_shape=jax.ShapeDtypeStruct((N, H, WCout), x_nchw.dtype),
        grid_spec=pltpu.PrefetchScalarGridSpec(
            num_scalar_prefetch=0,
            grid=(N,),
            in_specs=[
                pl.BlockSpec((None, H, WCin), lambda n: (n, 0, 0)),
                pl.BlockSpec((3, WCin, WCout), lambda n: (0, 0, 0)),
                pl.BlockSpec((1, WCout), lambda n: (0, 0)),
                pl.BlockSpec((3, WCout, WCout), lambda n: (0, 0, 0)),
                pl.BlockSpec((1, WCout), lambda n: (0, 0)),
            ],
            out_specs=pl.BlockSpec((None, H, WCout), lambda n: (n, 0, 0)),
        ),
        compiler_params=pltpu.CompilerParams(
            dimension_semantics=("parallel",)),
        cost_estimate=cost,
    )(x_rows, t1, b1_row, t2, b2_row)

    # (N, H, W*Cout) -> NHWC -> NCHW
    return jnp.transpose(out_rows.reshape(N, H, W, Cout), (0, 3, 1, 2))


def reference_double_conv(x, w1, b1, w2, b2, *, compute_dtype=jnp.bfloat16):
    """XLA reference with matching precision (bf16 operands, f32 accumulate)."""
    dn = ("NCHW", "OIHW", "NCHW")
    y = jax.lax.conv_general_dilated(
        x.astype(compute_dtype), w1.astype(compute_dtype), (1, 1), "SAME",
        dimension_numbers=dn, preferred_element_type=jnp.float32)
    y = jax.nn.relu(y + b1[None, :, None, None])
    y = jax.lax.conv_general_dilated(
        y.astype(compute_dtype), w2.astype(compute_dtype), (1, 1), "SAME",
        dimension_numbers=dn, preferred_element_type=jnp.float32)
    y = jax.nn.relu(y + b2[None, :, None, None])
    return y.astype(x.dtype)


if __name__ == "__main__":
    # deterministic synthetic params (Conv2d(in_c, out_c, 3, padding=1) x2)
    N, in_c, out_c, H, W = 2, 4, 8, 16, 16
    key = jax.random.PRNGKey(0)
    kx, k1, kb1, k2, kb2 = jax.random.split(key, 5)

    x = jax.random.normal(kx, (N, in_c, H, W), jnp.float32)
    w1 = 0.1 * jax.random.normal(k1, (out_c, in_c, 3, 3), jnp.float32)
    b1 = 0.1 * jax.random.normal(kb1, (out_c,), jnp.float32)
    w2 = 0.1 * jax.random.normal(k2, (out_c, out_c, 3, 3), jnp.float32)
    b2 = 0.1 * jax.random.normal(kb2, (out_c,), jnp.float32)

    out = jax.block_until_ready(double_conv(x, w1, b1, w2, b2))
    ref = jax.block_until_ready(reference_double_conv(x, w1, b1, w2, b2))

    assert out.shape == (N, out_c, H, W), out.shape
    err = float(jnp.max(jnp.abs(out - ref)))
    assert jnp.allclose(out, ref, atol=5e-3, rtol=5e-3), f"mismatch vs reference, max abs err={err}"
    print("KERNEL_OK")
</pallas_src>

<mosaic_0001>
module attributes {stable_mosaic.version = 11 : i64} {
  func.func @_double_conv_kernel(%arg0: i32, %arg1: memref<1x16x64xbf16, #tpu.memory_space<vmem>>, %arg2: memref<3x64x128xbf16, #tpu.memory_space<vmem>>, %arg3: memref<1x128xf32, #tpu.memory_space<vmem>>, %arg4: memref<3x128x128xbf16, #tpu.memory_space<vmem>>, %arg5: memref<1x128xf32, #tpu.memory_space<vmem>>, %arg6: memref<1x16x128xf32, #tpu.memory_space<vmem>>) attributes {dimension_semantics = [#tpu.dimension_semantics<parallel>], iteration_bounds = array<i64: 2>, scalar_prefetch = 0 : i64, scratch_operands = 0 : i64, tpu.core_type = #tpu.core_type<tc>, window_params = [{transform_indices = @transform_0, window_bounds = array<i64: 1, 16, 64>}, {pipeline_mode = #tpu.pipeline_mode<synchronous>, transform_indices = @transform_1, window_bounds = array<i64: 3, 64, 128>}, {pipeline_mode = #tpu.pipeline_mode<synchronous>, transform_indices = @transform_2, window_bounds = array<i64: 1, 128>}, {pipeline_mode = #tpu.pipeline_mode<synchronous>, transform_indices = @transform_3, window_bounds = array<i64: 3, 128, 128>}, {pipeline_mode = #tpu.pipeline_mode<synchronous>, transform_indices = @transform_4, window_bounds = array<i64: 1, 128>}, {transform_indices = @transform_5, window_bounds = array<i64: 1, 16, 128>}]} {
    %c0 = arith.constant 0 : index
    %c0_0 = arith.constant 0 : index
    %c0_1 = arith.constant 0 : index
    %0 = vector.load %arg1[%c0, %c0_0, %c0_1] : memref<1x16x64xbf16, #tpu.memory_space<vmem>>, vector<1x16x64xbf16>
    %1 = vector.shape_cast %0 : vector<1x16x64xbf16> to vector<16x64xbf16>
    %c0_2 = arith.constant 0 : index
    %c0_3 = arith.constant 0 : index
    %c0_4 = arith.constant 0 : index
    %2 = vector.load %arg2[%c0_2, %c0_3, %c0_4] : memref<3x64x128xbf16, #tpu.memory_space<vmem>>, vector<1x64x128xbf16>
    %3 = vector.shape_cast %2 : vector<1x64x128xbf16> to vector<64x128xbf16>
    %cst = arith.constant dense<0.000000e+00> : vector<16x128xf32>
    %4 = tpu.matmul %1, %3, %cst {dimension_numbers = #tpu.dot_dimension_numbers<[1], [0], [0], [1], [0, 0, 1, 1], [], []>} : vector<16x64xbf16>, vector<64x128xbf16>, vector<16x128xf32> -> vector<16x128xf32>
    %c1 = arith.constant 1 : index
    %c0_5 = arith.constant 0 : index
    %c0_6 = arith.constant 0 : index
    %5 = vector.load %arg2[%c1, %c0_5, %c0_6] : memref<3x64x128xbf16, #tpu.memory_space<vmem>>, vector<1x64x128xbf16>
    %6 = vector.shape_cast %5 : vector<1x64x128xbf16> to vector<64x128xbf16>
    %cst_7 = arith.constant dense<0.000000e+00> : vector<16x128xf32>
    %7 = tpu.matmul %1, %6, %cst_7 {dimension_numbers = #tpu.dot_dimension_numbers<[1], [0], [0], [1], [0, 0, 1, 1], [], []>} : vector<16x64xbf16>, vector<64x128xbf16>, vector<16x128xf32> -> vector<16x128xf32>
    %c2 = arith.constant 2 : index
    %c0_8 = arith.constant 0 : index
    %c0_9 = arith.constant 0 : index
    %8 = vector.load %arg2[%c2, %c0_8, %c0_9] : memref<3x64x128xbf16, #tpu.memory_space<vmem>>, vector<1x64x128xbf16>
    %9 = vector.shape_cast %8 : vector<1x64x128xbf16> to vector<64x128xbf16>
    %cst_10 = arith.constant dense<0.000000e+00> : vector<16x128xf32>
    %10 = tpu.matmul %1, %9, %cst_10 {dimension_numbers = #tpu.dot_dimension_numbers<[1], [0], [0], [1], [0, 0, 1, 1], [], []>} : vector<16x64xbf16>, vector<64x128xbf16>, vector<16x128xf32> -> vector<16x128xf32>
    %cst_11 = arith.constant 0.000000e+00 : f32
    %11 = vector.broadcast %cst_11 : f32 to vector<1x128xf32>
    %12 = vector.extract_strided_slice %4 {offsets = [0, 0], sizes = [15, 128], strides = [1, 1]} : vector<16x128xf32> to vector<15x128xf32>
    %13 = tpu.concatenate %11, %12 in 0 : vector<1x128xf32>, vector<15x128xf32> -> vector<16x128xf32>
    %14 = vector.extract_strided_slice %10 {offsets = [1, 0], sizes = [15, 128], strides = [1, 1]} : vector<16x128xf32> to vector<15x128xf32>
    %15 = tpu.concatenate %14, %11 in 0 : vector<15x128xf32>, vector<1x128xf32> -> vector<16x128xf32>
    %16 = arith.addf %7, %13 : vector<16x128xf32>
    %17 = arith.addf %16, %15 : vector<16x128xf32>
    %c0_12 = arith.constant 0 : index
    %c0_13 = arith.constant 0 : index
    %18 = vector.load %arg3[%c0_12, %c0_13] : memref<1x128xf32, #tpu.memory_space<vmem>>, vector<1x128xf32>
    %19 = vector.broadcast %18 : vector<1x128xf32> to vector<16x128xf32>
    %20 = arith.addf %17, %19 : vector<16x128xf32>
    %cst_14 = arith.constant 0.000000e+00 : f32
    %21 = vector.broadcast %cst_14 : f32 to vector<16x128xf32>
    %22 = arith.maximumf %20, %21 : vector<16x128xf32>
    %23 = arith.truncf %22 : vector<16x128xf32> to vector<16x128xbf16>
    %c0_15 = arith.constant 0 : index
    %c0_16 = arith.constant 0 : index
    %c0_17 = arith.constant 0 : index
    %24 = vector.load %arg4[%c0_15, %c0_16, %c0_17] : memref<3x128x128xbf16, #tpu.memory_space<vmem>>, vector<1x128x128xbf16>
    %25 = vector.shape_cast %24 : vector<1x128x128xbf16> to vector<128x128xbf16>
    %cst_18 = arith.constant dense<0.000000e+00> : vector<16x128xf32>
    %26 = tpu.matmul %23, %25, %cst_18 {dimension_numbers = #tpu.dot_dimension_numbers<[1], [0], [0], [1], [0, 0, 1, 1], [], []>} : vector<16x128xbf16>, vector<128x128xbf16>, vector<16x128xf32> -> vector<16x128xf32>
    %c1_19 = arith.constant 1 : index
    %c0_20 = arith.constant 0 : index
    %c0_21 = arith.constant 0 : index
    %27 = vector.load %arg4[%c1_19, %c0_20, %c0_21] : memref<3x128x128xbf16, #tpu.memory_space<vmem>>, vector<1x128x128xbf16>
    %28 = vector.shape_cast %27 : vector<1x128x128xbf16> to vector<128x128xbf16>
    %cst_22 = arith.constant dense<0.000000e+00> : vector<16x128xf32>
    %29 = tpu.matmul %23, %28, %cst_22 {dimension_numbers = #tpu.dot_dimension_numbers<[1], [0], [0], [1], [0, 0, 1, 1], [], []>} : vector<16x128xbf16>, vector<128x128xbf16>, vector<16x128xf32> -> vector<16x128xf32>
    %c2_23 = arith.constant 2 : index
    %c0_24 = arith.constant 0 : index
    %c0_25 = arith.constant 0 : index
    %30 = vector.load %arg4[%c2_23, %c0_24, %c0_25] : memref<3x128x128xbf16, #tpu.memory_space<vmem>>, vector<1x128x128xbf16>
    %31 = vector.shape_cast %30 : vector<1x128x128xbf16> to vector<128x128xbf16>
    %cst_26 = arith.constant dense<0.000000e+00> : vector<16x128xf32>
    %32 = tpu.matmul %23, %31, %cst_26 {dimension_numbers = #tpu.dot_dimension_numbers<[1], [0], [0], [1], [0, 0, 1, 1], [], []>} : vector<16x128xbf16>, vector<128x128xbf16>, vector<16x128xf32> -> vector<16x128xf32>
    %cst_27 = arith.constant 0.000000e+00 : f32
    %33 = vector.broadcast %cst_27 : f32 to vector<1x128xf32>
    %34 = vector.extract_strided_slice %26 {offsets = [0, 0], sizes = [15, 128], strides = [1, 1]} : vector<16x128xf32> to vector<15x128xf32>
    %35 = tpu.concatenate %33, %34 in 0 : vector<1x128xf32>, vector<15x128xf32> -> vector<16x128xf32>
    %36 = vector.extract_strided_slice %32 {offsets = [1, 0], sizes = [15, 128], strides = [1, 1]} : vector<16x128xf32> to vector<15x128xf32>
    %37 = tpu.concatenate %36, %33 in 0 : vector<15x128xf32>, vector<1x128xf32> -> vector<16x128xf32>
    %38 = arith.addf %29, %35 : vector<16x128xf32>
    %39 = arith.addf %38, %37 : vector<16x128xf32>
    %c0_28 = arith.constant 0 : index
    %c0_29 = arith.constant 0 : index
    %40 = vector.load %arg5[%c0_28, %c0_29] : memref<1x128xf32, #tpu.memory_space<vmem>>, vector<1x128xf32>
    %41 = vector.broadcast %40 : vector<1x128xf32> to vector<16x128xf32>
    %42 = arith.addf %39, %41 : vector<16x128xf32>
    %cst_30 = arith.constant 0.000000e+00 : f32
    %43 = vector.broadcast %cst_30 : f32 to vector<16x128xf32>
    %44 = arith.maximumf %42, %43 : vector<16x128xf32>
    %c0_31 = arith.constant 0 : index
    %c0_32 = arith.constant 0 : index
    %c0_33 = arith.constant 0 : index
    %45 = vector.load %arg6[%c0_31, %c0_32, %c0_33] : memref<1x16x128xf32, #tpu.memory_space<vmem>>, vector<1x16x128xf32>
    %46 = vector.shape_cast %45 : vector<1x16x128xf32> to vector<16x128xf32>
    %47 = vector.shape_cast %44 : vector<16x128xf32> to vector<1x16x128xf32>
    tpu.vector_store %arg6[%c0_31, %c0_32, %c0_33], %47 {strides = array<i32>} : memref<1x16x128xf32, #tpu.memory_space<vmem>>, vector<1x16x128xf32>,
    return
  }
  func.func @transform_0(%arg0: i32) -> (i32, i32, i32) {
    %c0_i32 = arith.constant 0 : i32
    %c0_i32_0 = arith.constant 0 : i32
    %c0_i32_1 = arith.constant 0 : i32
    return %arg0, %c0_i32, %c0_i32_0 : i32, i32, i32
  }
  func.func @transform_1(%arg0: i32) -> (i32, i32, i32) {
    %c0_i32 = arith.constant 0 : i32
    %c0_i32_0 = arith.constant 0 : i32
    %c0_i32_1 = arith.constant 0 : i32
    %c0_i32_2 = arith.constant 0 : i32
    return %c0_i32, %c0_i32_0, %c0_i32_1 : i32, i32, i32
  }
  func.func @transform_2(%arg0: i32) -> (i32, i32) {
    %c0_i32 = arith.constant 0 : i32
    %c0_i32_0 = arith.constant 0 : i32
    %c0_i32_1 = arith.constant 0 : i32
    return %c0_i32, %c0_i32_0 : i32, i32
  }
  func.func @transform_3(%arg0: i32) -> (i32, i32, i32) {
    %c0_i32 = arith.constant 0 : i32
    %c0_i32_0 = arith.constant 0 : i32
    %c0_i32_1 = arith.constant 0 : i32
    %c0_i32_2 = arith.constant 0 : i32
    return %c0_i32, %c0_i32_0, %c0_i32_1 : i32, i32, i32
  }
  func.func @transform_4(%arg0: i32) -> (i32, i32) {
    %c0_i32 = arith.constant 0 : i32
    %c0_i32_0 = arith.constant 0 : i32
    %c0_i32_1 = arith.constant 0 : i32
    return %c0_i32, %c0_i32_0 : i32, i32
  }
  func.func @transform_5(%arg0: i32) -> (i32, i32, i32) {
    %c0_i32 = arith.constant 0 : i32
    %c0_i32_0 = arith.constant 0 : i32
    %c0_i32_1 = arith.constant 0 : i32
    return %arg0, %c0_i32, %c0_i32_0 : i32, i32, i32
  }
}

</mosaic_0001>

<llo_original>
// kernel: tpu_custom_call.1
$region0: #{tpu_custom_call.1}
  #allocation0 [shape = 'u32[]', space=smem, size = 0x4, offset = 0x4, fixed_abs, tag = 'smem constant byte address 0x4 - core index']
  #allocation1 [shape = 'u32[144,128]{1,0:T(1,128)}', space=vmem, size = 0x12000, scoped, tag = 'internal scratch']
  %s0 = inlined_call_operand.hbm [shape: bf16[2,16,64], index: 0, kind: input, shape index: {}]
  %s1 = inlined_call_operand.hbm [shape: bf16[3,64,128], index: 1, kind: input, shape index: {}]
  %s2 = inlined_call_operand.vmem [shape: f32[1,128], index: 2, kind: input, shape index: {}]
  %s3 = inlined_call_operand.hbm [shape: bf16[3,128,128], index: 3, kind: input, shape index: {}]
  %s4 = inlined_call_operand.vmem [shape: f32[1,128], index: 4, kind: input, shape index: {}]
  %s5 = inlined_call_operand.hbm [shape: f32[2,16,128], index: 5, kind: output, shape index: {}]
  %s6 = sld [smem:[#allocation0]]
  $region65: #{tpu_custom_call.1} parent=0
    _
  %s8 = ssub.s32 1, %s6
  %s9 = scalar_select 0, %s8, %s6
  $region1: #{tpu_custom_call.1} parent=0
    #allocation2 [shape = 'u8[8192]{0}', space=vmem, size = 0x2000, scoped, tag = 'input window, operand 0']
    #allocation3 [shape = 's32[2]{0}', space=sflag, size = 0x8, scoped, tag = 'scoped memory for tpu_custom_call.1']
    #allocation4 [shape = 's32[2]{0}', space=sflag, size = 0x8, scoped, tag = 'scoped memory for tpu_custom_call.1']
    #allocation5 [shape = 'u8[49152]{0}', space=vmem, size = 0xc000, scoped, tag = 'input window, operand 1, single buffered']
    #allocation6 [shape = 's32[1]{0}', space=sflag, size = 0x4, scoped, tag = 'scoped memory for tpu_custom_call.1']
    #allocation7 [shape = 'u8[98304]{0}', space=vmem, size = 0x18000, scoped, tag = 'input window, operand 3, single buffered']
    #allocation8 [shape = 'u8[16384]{0}', space=vmem, size = 0x4000, scoped, tag = 'output window, operand 0']
    %10 = vsyncpa [#allocation3], 0
    %s11 = scalar_lea.sflag [#allocation3], 1
    %12 = vsyncpa %s11, 0
    %13 = vsyncpa [#allocation6], 0
    %14 = vsyncpa [#allocation4], 0
    %s15 = scalar_lea.sflag [#allocation4], 1
    %16 = vsyncpa %s15, 0
    loop: start=0, step=1, limit=4
    $region2: #{tpu_custom_call.1} parent=1 // loop_pre_header
      _
    $region3: #{tpu_custom_call.1} parent=1 // loop_header
      %s18 = sphi 0, %s22
      %p19 = scmp.ge.s32.totalorder %s18, 4
      %s28 = sphi 0, %s30
      %s31 = sphi 0, %s28
      %s32 = sphi 0, %s31
      %s48 = sphi 0, %s32
      %s52 = sphi 0, %s52
      %s54 = sphi 0, %s52
      %s55 = sphi 0, %s54
      %s69 = sphi 0, %s55
      %s73 = sphi 0, %s73
      %s75 = sphi 0, %s73
      %s76 = sphi 0, %s75
      %s90 = sphi 0, %s76
      %s94 = sphi 0, %s94
      %s96 = sphi 0, %s94
      %s97 = sphi 0, %s96
      %s111 = sphi 0, %s97
      %s115 = sphi 0, %s115
      %s117 = sphi 0, %s115
      %s118 = sphi 0, %s117
      %s132 = sphi 0, %s118
      %s138 = sphi 0, %s140
      %s141 = sphi 0, %s138
      %s142 = sphi 0, %s141
      %s158 = sphi 0, %s142
    $region4: #{tpu_custom_call.1} parent=1 // loop_header_branch
      %21 = sbr.rel (%p19) target = $region8
    $region5: #{tpu_custom_call.1} parent=1 // loop_body
      %s23 = ssub.s32 %s18, 1
      %s24 = ssub.s32 %s18, 2
      %s25 = sadd.s32 %s18, 1
      %s26 = ssub.s32 %s18, %s25
      %p27 = scmp.eq.s32.totalorder %s26, 0
      %s29 = sadd.s32 %s28, 1
      %s30 = scalar_select %p27, %s28, %s29
      %p33 = pneg %p27
      %p34 = scmp.eq.s32.totalorder %s18, 1
      %p35 = por %p33, %p34
      %p36 = scmp.ne.s32.totalorder %s28, %s31
      %p37 = scmp.eq.s32.totalorder %s18, 0
      %p38 = por %p36, %p37
      %p39 = scmp.ne.s32.totalorder %s28, %s31
      %p40 = scmp.eq.s32.totalorder %s23, 1
      %p41 = por %p39, %p40
      %p42 = scmp.ne.s32.totalorder %s31, %s32
      %p43 = scmp.eq.s32.totalorder %s23, 0
      %p44 = por %p42, %p43
      %p45 = scmp.ne.s32.totalorder %s31, %s32
      %p46 = scmp.eq.s32.totalorder %s24, 1
      %p47 = por %p45, %p46
      %p49 = scmp.ne.s32.totalorder %s32, %s48
      %p50 = scmp.eq.s32.totalorder %s24, 0
      %p51 = por %p49, %p50
      %s53 = sadd.s32 %s52, 1
      %p56 = scmp.eq.s32.totalorder %s18, 1
      %p57 = scmp.ne.s32.totalorder %s52, %s54
      %p58 = scmp.eq.s32.totalorder %s18, 0
      %p59 = por %p57, %p58
      %p60 = scmp.ne.s32.totalorder %s52, %s54
      %p61 = scmp.eq.s32.totalorder %s23, 1
      %p62 = por %p60, %p61
      %p63 = scmp.ne.s32.totalorder %s54, %s55
      %p64 = scmp.eq.s32.totalorder %s23, 0
      %p65 = por %p63, %p64
      %p66 = scmp.ne.s32.totalorder %s54, %s55
      %p67 = scmp.eq.s32.totalorder %s24, 1
      %p68 = por %p66, %p67
      %p70 = scmp.ne.s32.totalorder %s55, %s69
      %p71 = scmp.eq.s32.totalorder %s24, 0
      %p72 = por %p70, %p71
      %s74 = sadd.s32 %s73, 1
      %p77 = scmp.eq.s32.totalorder %s18, 1
      %p78 = scmp.ne.s32.totalorder %s73, %s75
      %p79 = scmp.eq.s32.totalorder %s18, 0
      %p80 = por %p78, %p79
      %p81 = scmp.ne.s32.totalorder %s73, %s75
      %p82 = scmp.eq.s32.totalorder %s23, 1
      %p83 = por %p81, %p82
      %p84 = scmp.ne.s32.totalorder %s75, %s76
      %p85 = scmp.eq.s32.totalorder %s23, 0
      %p86 = por %p84, %p85
      %p87 = scmp.ne.s32.totalorder %s75, %s76
      %p88 = scmp.eq.s32.totalorder %s24, 1
      %p89 = por %p87, %p88
      %p91 = scmp.ne.s32.totalorder %s76, %s90
      %p92 = scmp.eq.s32.totalorder %s24, 0
      %p93 = por %p91, %p92
      %s95 = sadd.s32 %s94, 1
      %p98 = scmp.eq.s32.totalorder %s18, 1
      %p99 = scmp.ne.s32.totalorder %s94, %s96
      %p100 = scmp.eq.s32.totalorder %s18, 0
      %p101 = por %p99, %p100
      %p102 = scmp.ne.s32.totalorder %s94, %s96
      %p103 = scmp.eq.s32.totalorder %s23, 1
      %p104 = por %p102, %p103
      %p105 = scmp.ne.s32.totalorder %s96, %s97
      %p106 = scmp.eq.s32.totalorder %s23, 0
      %p107 = por %p105, %p106
      %p108 = scmp.ne.s32.totalorder %s96, %s97
      %p109 = scmp.eq.s32.totalorder %s24, 1
      %p110 = por %p108, %p109
      %p112 = scmp.ne.s32.totalorder %s97, %s111
      %p113 = scmp.eq.s32.totalorder %s24, 0
      %p114 = por %p112, %p113
      %s116 = sadd.s32 %s115, 1
      %p119 = scmp.eq.s32.totalorder %s18, 1
      %p120 = scmp.ne.s32.totalorder %s115, %s117
      %p121 = scmp.eq.s32.totalorder %s18, 0
      %p122 = por %p120, %p121
      %p123 = scmp.ne.s32.totalorder %s115, %s117
      %p124 = scmp.eq.s32.totalorder %s23, 1
      %p125 = por %p123, %p124
      %p126 = scmp.ne.s32.totalorder %s117, %s118
      %p127 = scmp.eq.s32.totalorder %s23, 0
      %p128 = por %p126, %p127
      %p129 = scmp.ne.s32.totalorder %s117, %s118
      %p130 = scmp.eq.s32.totalorder %s24, 1
      %p131 = por %p129, %p130
      %p133 = scmp.ne.s32.totalorder %s118, %s132
      %p134 = scmp.eq.s32.totalorder %s24, 0
      %p135 = por %p133, %p134
      %s136 = ssub.s32 %s18, %s25
      %p137 = scmp.eq.s32.totalorder %s136, 0
      %s139 = sadd.s32 %s138, 1
      %s140 = scalar_select %p137, %s138, %s139
      %p143 = pneg %p137
      %p144 = scmp.eq.s32.totalorder %s18, 1
      %p145 = por %p143, %p144
      %p146 = scmp.ne.s32.totalorder %s138, %s141
      %p147 = scmp.eq.s32.totalorder %s18, 0
      %p148 = por %p146, %p147
      %p149 = scmp.ne.s32.totalorder %s138, %s141
      %p150 = scmp.eq.s32.totalorder %s23, 1
      %p151 = por %p149, %p150
      %p152 = scmp.ne.s32.totalorder %s141, %s142
      %p153 = scmp.eq.s32.totalorder %s23, 0
      %p154 = por %p152, %p153
      %p155 = scmp.ne.s32.totalorder %s141, %s142
      %p156 = scmp.eq.s32.totalorder %s24, 1
      %p157 = por %p155, %p156
      %p159 = scmp.ne.s32.totalorder %s142, %s158
      %p160 = scmp.eq.s32.totalorder %s24, 0
      %p161 = por %p159, %p160
      %p162 = scmp.le.s32.totalorder 1, %s18
      %p163 = scmp.lt.s32.totalorder %s18, 3
      %p164 = pnand %p162, %p163
      %p165 = pneg %p164
      // Predicated region
      $region9: #{tpu_custom_call.1} parent=5 // pred_check
        _
      $region10: #{tpu_custom_call.1} parent=5 // pred_check_branch
        %167 = sbr.rel (%p164) target = $region12
      $region11: #{tpu_custom_call.1} parent=5 // pred_region
        %s168 = ssub.s32 %s18, 1
        // Predicated region
        $region13: #{tpu_custom_call.1} parent=11 // pred_check
          %p169 = pneg %p65
        $region14: #{tpu_custom_call.1} parent=11 // pred_check_branch
          %171 = sbr.rel (%p169) target = $region16
        $region15: #{tpu_custom_call.1} parent=11 // pred_region
          %s173 = ssub.s32 1536, 1536
          %174 = vsyncadd [#allocation6], %s173
          %s175 = sshll.u32 [#allocation5], 4
          %s176 = int_to_ptr.vmem [resolvable:$true] %s175
          %181 = dma.hbm_to_vmem [thread:$0]  %s1, 1536, %s176, [#allocation6], 64, 64, 4
        $region16: #{tpu_custom_call.1} parent=11 // pred_fallthru
          _
        // Predicated region
        $region17: #{tpu_custom_call.1} parent=11 // pred_check
          %p182 = pneg %p86
        $region18: #{tpu_custom_call.1} parent=11 // pred_check_branch
          %184 = sbr.rel (%p182) target = $region20
        $region19: #{tpu_custom_call.1} parent=11 // pred_region
          _
        $region20: #{tpu_custom_call.1} parent=11 // pred_fallthru
          _
        // Predicated region
        $region21: #{tpu_custom_call.1} parent=11 // pred_check
          %p185 = pneg %p107
        $region22: #{tpu_custom_call.1} parent=11 // pred_check_branch
          %187 = sbr.rel (%p185) target = $region24
        $region23: #{tpu_custom_call.1} parent=11 // pred_region
          %s189 = ssub.s32 3072, 3072
          %190 = vsyncadd [#allocation6], %s189
          %s191 = sshll.u32 [#allocation7], 4
          %s192 = int_to_ptr.vmem [resolvable:$true] %s191
          %197 = dma.hbm_to_vmem [thread:$0]  %s3, 3072, %s192, [#allocation6], 64, 64, 4
        $region24: #{tpu_custom_call.1} parent=11 // pred_fallthru
          _
        // Predicated region
        $region25: #{tpu_custom_call.1} parent=11 // pred_check
          %p198 = pneg %p128
        $region26: #{tpu_custom_call.1} parent=11 // pred_check_branch
          %200 = sbr.rel (%p198) target = $region28
        $region27: #{tpu_custom_call.1} parent=11 // pred_region
          _
        $region28: #{tpu_custom_call.1} parent=11 // pred_fallthru
          _
      $region12: #{tpu_custom_call.1} parent=5 // pred_fallthru
        _
      %p201 = scmp.lt.s32.totalorder %s18, 2
      // Predicated region
      $region29: #{tpu_custom_call.1} parent=5 // pred_check
        %p202 = pneg %p201
      $region30: #{tpu_custom_call.1} parent=5 // pred_check_branch
        %204 = sbr.rel (%p202) target = $region32
      $region31: #{tpu_custom_call.1} parent=5 // pred_region
        // Predicated region
        $region33: #{tpu_custom_call.1} parent=31 // pred_check
          %p205 = pneg %p38
        $region34: #{tpu_custom_call.1} parent=31 // pred_check_branch
          %207 = sbr.rel (%p205) target = $region36
        $region35: #{tpu_custom_call.1} parent=31 // pred_region
          %s208 = sand.u32 %s28, 1
          %s209 = scalar_lea.sflag [#allocation3], %s208
          %s210 = sand.u32 %s28, 1
          %s211 = smul.addr %s210, 8
          %s212 = scalar_lea.vmem [#allocation2], %s211
          %s214 = ssub.s32 128, 128
          %215 = vsyncadd %s209, %s214
          %s216 = smul.addr %s18, 2
          %s217 = smul.addr %s216, 64
          %s218 = scalar_lea.hbm %s0, %s217
          %s219 = sshll.u32 %s212, 4
          %s220 = int_to_ptr.vmem [resolvable:$true] %s219
          %225 = dma.hbm_to_vmem [thread:$0]  %s218, 128, %s220, %s209, 64, 64, 4
        $region36: #{tpu_custom_call.1} parent=31 // pred_fallthru
          _
      $region32: #{tpu_custom_call.1} parent=5 // pred_fallthru
        _
      %p226 = scmp.le.s32.totalorder 1, %s18
      %p227 = scmp.lt.s32.totalorder %s18, 3
      %p228 = pnand %p226, %p227
      %p229 = pneg %p228
      // Predicated region
      $region37: #{tpu_custom_call.1} parent=5 // pred_check
        _
      $region38: #{tpu_custom_call.1} parent=5 // pred_check_branch
        %231 = sbr.rel (%p228) target = $region40
      $region39: #{tpu_custom_call.1} parent=5 // pred_region
        %s232 = ssub.s32 %s18, 1
        %s233 = sand.u32 %s31, 1
        %s234 = scalar_lea.sflag [#allocation3], %s233
        %s235 = sand.u32 %s31, 1
        %s236 = smul.addr %s235, 8
        %s237 = scalar_lea.vmem [#allocation2], %s236
        // Predicated region
        $region41: #{tpu_custom_call.1} parent=39 // pred_check
          %p238 = pneg %p44
        $region42: #{tpu_custom_call.1} parent=39 // pred_check_branch
          %240 = sbr.rel (%p238) target = $region44
        $region43: #{tpu_custom_call.1} parent=39 // pred_region
          %241 = dma.done %s234, 128
        $region44: #{tpu_custom_call.1} parent=39 // pred_fallthru
          _
        // Predicated region
        $region45: #{tpu_custom_call.1} parent=39 // pred_check
          %p242 = pneg %p65
        $region46: #{tpu_custom_call.1} parent=39 // pred_check_branch
          %244 = sbr.rel (%p242) target = $region48
        $region47: #{tpu_custom_call.1} parent=39 // pred_region
          %245 = dma.done [#allocation6], 1536
        $region48: #{tpu_custom_call.1} parent=39 // pred_fallthru
          _
        // Predicated region
        $region49: #{tpu_custom_call.1} parent=39 // pred_check
          %p246 = pneg %p107
        $region50: #{tpu_custom_call.1} parent=39 // pred_check_branch
          %248 = sbr.rel (%p246) target = $region52
        $region51: #{tpu_custom_call.1} parent=39 // pred_region
          %249 = dma.done [#allocation6], 3072
        $region52: #{tpu_custom_call.1} parent=39 // pred_fallthru
          _
        %s250 = sand.u32 %s31, 1
        %s251 = scalar_lea.sflag [#allocation3], %s250
        %s252 = sand.u32 %s31, 1
        %s253 = smul.addr %s252, 8
        %s254 = scalar_lea.vmem [#allocation2], %s253
        %p255 = pneg %p44
        %p256 = pneg %p41
        %p257 = pneg %p65
        %p258 = pneg %p62
        %p259 = pneg %p86
        %p260 = pneg %p83
        %p261 = pneg %p107
        %p262 = pneg %p104
        %p263 = pneg %p128
        %p264 = pneg %p125
        %p265 = pneg %p154
        %p266 = pneg %p151
        %s267 = sand.u32 %s141, 1
        %s268 = scalar_lea.sflag [#allocation4], %s267
        %s269 = sand.u32 %s141, 1
        %s270 = smul.addr %s269, 16
        %s271 = scalar_lea.vmem [#allocation8], %s270
        %v273 = vld [vmem:[%s237] sm:$0xf]
        %v274 = vld [vmem:[%s237 + $0x4] sm:$0xf]
        %v275 = vld [vmem:[#allocation5] sm:$0xf]
        %v276 = vld [vmem:[#allocation5 + $0x4] sm:$0xf]
        %v277 = vld [vmem:[#allocation5 + $0x8] sm:$0xf]
        %v278 = vld [vmem:[#allocation5 + $0xc] sm:$0xf]
        %v279 = vld [vmem:[#allocation5 + $0x10] sm:$0xf]
        %v280 = vld [vmem:[#allocation5 + $0x14] sm:$0xf]
        %v281 = vld [vmem:[#allocation5 + $0x18] sm:$0xf]
        %v282 = vld [vmem:[#allocation5 + $0x1c] sm:$0xf]
        %v285 = vunpack.c.l.b16 %v273
        %v286 = vunpack.c.l.b16 %v274
        %v287 = vpack.c.b16 %v286, %v285
        %v296 = vunpack.c.l.b16 %v275
        %v297 = vunpack.c.l.b16 %v276
        %v298 = vunpack.c.l.b16 %v277
        %v299 = vunpack.c.l.b16 %v278
        %v300 = vunpack.c.l.b16 %v279
        %v301 = vunpack.c.l.b16 %v280
        %v302 = vunpack.c.l.b16 %v281
        %v303 = vunpack.c.l.b16 %v282
        %v304 = vpack.c.b16 %v297, %v296
        %v305 = vpack.c.b16 %v299, %v298
        %v306 = vpack.c.b16 %v301, %v300
        %v307 = vpack.c.b16 %v303, %v302
        %vm312 = vcmask 523264
        %v314 = vsel %vm312, %v287, 0
        %316 = vmatprep.subr.bf16.mxu0 0
        %317 = vmatpush1.bf16.msra.mxu0 %v304
        %318 = vmatprep.subr.bf16.mxu0 0
        %319 = vmatpush1.bf16.msra.mxu0 %v305
        %320 = vmatprep.subr.bf16.mxu0 0
        %321 = vmatpush1.bf16.msra.mxu0 %v306
        %322 = vmatprep.subr.bf16.mxu0 0
        %323 = vmatpush1.bf16.msra.mxu0 %v307
        %324 = vmatprep.subr.bf16.mxu0 0
        %325 = vmatpush1.bf16.msra.mxu0 0
        %326 = vmatprep.subr.bf16.mxu0 0
        %327 = vmatpush1.bf16.msra.mxu0 0
        %328 = vmatprep.subr.bf16.mxu0 0
        %329 = vmatpush1.bf16.msra.mxu0 0
        %330 = vmatprep.subr.bf16.mxu0 0
        %331 = vmatpush1.bf16.msra.mxu0 0
        %332 = vmatprep.subr.bf16.mxu0 0
        %333 = vmatpush1.bf16.msra.mxu0 0
        %334 = vmatprep.subr.bf16.mxu0 0
        %335 = vmatpush1.bf16.msra.mxu0 0
        %336 = vmatprep.subr.bf16.mxu0 0
        %337 = vmatpush1.bf16.msra.mxu0 0
        %338 = vmatprep.subr.bf16.mxu0 0
        %339 = vmatpush1.bf16.msra.mxu0 0
        %340 = vmatprep.subr.bf16.mxu0 0
        %341 = vmatpush1.bf16.msra.mxu0 0
        %342 = vmatprep.subr.bf16.mxu0 0
        %343 = vmatpush1.bf16.msra.mxu0 0
        %344 = vmatprep.subr.bf16.mxu0 0
        %345 = vmatpush1.bf16.msra.mxu0 0
        %346 = vmatprep.subr.bf16.mxu0 0
        %347 = vmatpush1.bf16.msra.mxu0 0
        %348 = vmatprep.mubr.bf16.mxu0 0
        %349 = vmatmul.mubr.bf16.gmra.mrb[0].mxu0 %v314
        %v350 = vpop.f32.mrb[0].mxu0
        %v351 = vadd.f32 0.0, %v350
        %v352 = vpop.f32.mrb[0].mxu0
        %v353 = vpop.f32.mrb[0].mxu0
        %v354 = vadd.f32 0.0, %v353
        %v355 = vpop.f32.mrb[0].mxu0
        %356 = vdwg.mxu0
        %s357 = scalar_lea.vmem [#allocation5], 32
        %v358 = vld [vmem:[%s357] sm:$0xf]
        %v359 = vld [vmem:[%s357 + $0x4] sm:$0xf]
        %v360 = vld [vmem:[%s357 + $0x8] sm:$0xf]
        %v361 = vld [vmem:[%s357 + $0xc] sm:$0xf]
        %v362 = vld [vmem:[%s357 + $0x10] sm:$0xf]
        %v363 = vld [vmem:[%s357 + $0x14] sm:$0xf]
        %v364 = vld [vmem:[%s357 + $0x18] sm:$0xf]
        %v365 = vld [vmem:[%s357 + $0x1c] sm:$0xf]
        %s366 = scalar_lea.vmem [#allocation5], 64
        %v367 = vld [vmem:[%s366] sm:$0xf]
        %v368 = vld [vmem:[%s366 + $0x4] sm:$0xf]
        %v369 = vld [vmem:[%s366 + $0x8] sm:$0xf]
        %v370 = vld [vmem:[%s366 + $0xc] sm:$0xf]
        %v371 = vld [vmem:[%s366 + $0x10] sm:$0xf]
        %v372 = vld [vmem:[%s366 + $0x14] sm:$0xf]
        %v373 = vld [vmem:[%s366 + $0x18] sm:$0xf]
        %v374 = vld [vmem:[%s366 + $0x1c] sm:$0xf]
        %v383 = vunpack.c.l.b16 %v367
        %v384 = vunpack.c.l.b16 %v368
        %v385 = vunpack.c.l.b16 %v369
        %v386 = vunpack.c.l.b16 %v370
        %v387 = vunpack.c.l.b16 %v371
        %v388 = vunpack.c.l.b16 %v372
        %v389 = vunpack.c.l.b16 %v373
        %v390 = vunpack.c.l.b16 %v374
        %v391 = vpack.c.b16 %v384, %v383
        %v392 = vpack.c.b16 %v386, %v385
        %v393 = vpack.c.b16 %v388, %v387
        %v394 = vpack.c.b16 %v390, %v389
        %399 = vmatprep.subr.bf16.mxu0 0
        %400 = vmatpush1.bf16.msra.mxu0 %v391
        %401 = vmatprep.subr.bf16.mxu0 0
        %402 = vmatpush1.bf16.msra.mxu0 %v392
        %403 = vmatprep.subr.bf16.mxu0 0
        %404 = vmatpush1.bf16.msra.mxu0 %v393
        %405 = vmatprep.subr.bf16.mxu0 0
        %406 = vmatpush1.bf16.msra.mxu0 %v394
        %407 = vmatprep.subr.bf16.mxu0 0
        %408 = vmatpush1.bf16.msra.mxu0 0
        %409 = vmatprep.subr.bf16.mxu0 0
        %410 = vmatpush1.bf16.msra.mxu0 0
        %411 = vmatprep.subr.bf16.mxu0 0
        %412 = vmatpush1.bf16.msra.mxu0 0
        %413 = vmatprep.subr.bf16.mxu0 0
        %414 = vmatpush1.bf16.msra.mxu0 0
        %415 = vmatprep.subr.bf16.mxu0 0
        %416 = vmatpush1.bf16.msra.mxu0 0
        %417 = vmatprep.subr.bf16.mxu0 0
        %418 = vmatpush1.bf16.msra.mxu0 0
        %419 = vmatprep.subr.bf16.mxu0 0
        %420 = vmatpush1.bf16.msra.mxu0 0
        %421 = vmatprep.subr.bf16.mxu0 0
        %422 = vmatpush1.bf16.msra.mxu0 0
        %423 = vmatprep.subr.bf16.mxu0 0
        %424 = vmatpush1.bf16.msra.mxu0 0
        %425 = vmatprep.subr.bf16.mxu0 0
        %426 = vmatpush1.bf16.msra.mxu0 0
        %427 = vmatprep.subr.bf16.mxu0 0
        %428 = vmatpush1.bf16.msra.mxu0 0
        %429 = vmatprep.subr.bf16.mxu0 0
        %430 = vmatpush1.bf16.msra.mxu0 0
        %431 = vmatprep.mubr.bf16.mxu0 0
        %432 = vmatmul.mubr.bf16.gmra.mrb[0].mxu0 %v314
        %v433 = vpop.f32.mrb[0].mxu0
        %v434 = vadd.f32 0.0, %v433
        %v435 = vpop.f32.mrb[0].mxu0
        %v436 = vpop.f32.mrb[0].mxu0
        %v437 = vadd.f32 0.0, %v436
        %v438 = vpop.f32.mrb[0].mxu0
        %439 = vdwg.mxu0
        %vm442 = vcmask 1040384
        %v443 = vrot.slane %v351, 7
        %v444 = vrot.slane %v354, 7
        %v445 = vsel %vm442, %v443, %v444
        %v448 = vsel %vm442, 0.0, %v443
        %vm451 = vcmask 1046528
        %v452 = vrot.slane %v434, 1
        %v453 = vrot.slane %v437, 1
        %v454 = vsel %vm451, %v452, %v453
        %v457 = vsel %vm451, %v453, 0.0
        %v466 = vunpack.c.l.b16 %v358
        %v467 = vunpack.c.l.b16 %v359
        %v468 = vunpack.c.l.b16 %v360
        %v469 = vunpack.c.l.b16 %v361
        %v470 = vunpack.c.l.b16 %v362
        %v471 = vunpack.c.l.b16 %v363
        %v472 = vunpack.c.l.b16 %v364
        %v473 = vunpack.c.l.b16 %v365
        %v474 = vpack.c.b16 %v467, %v466
        %v475 = vpack.c.b16 %v469, %v468
        %v476 = vpack.c.b16 %v471, %v470
        %v477 = vpack.c.b16 %v473, %v472
        %482 = vmatprep.subr.bf16.mxu0 0
        %483 = vmatpush1.bf16.msra.mxu0 %v474
        %484 = vmatprep.subr.bf16.mxu0 0
        %485 = vmatpush1.bf16.msra.mxu0 %v475
        %486 = vmatprep.subr.bf16.mxu0 0
        %487 = vmatpush1.bf16.msra.mxu0 %v476
        %488 = vmatprep.subr.bf16.mxu0 0
        %489 = vmatpush1.bf16.msra.mxu0 %v477
        %490 = vmatprep.subr.bf16.mxu0 0
        %491 = vmatpush1.bf16.msra.mxu0 0
        %492 = vmatprep.subr.bf16.mxu0 0
        %493 = vmatpush1.bf16.msra.mxu0 0
        %494 = vmatprep.subr.bf16.mxu0 0
        %495 = vmatpush1.bf16.msra.mxu0 0
        %496 = vmatprep.subr.bf16.mxu0 0
        %497 = vmatpush1.bf16.msra.mxu0 0
        %498 = vmatprep.subr.bf16.mxu0 0
        %499 = vmatpush1.bf16.msra.mxu0 0
        %500 = vmatprep.subr.bf16.mxu0 0
        %501 = vmatpush1.bf16.msra.mxu0 0
        %502 = vmatprep.subr.bf16.mxu0 0
        %503 = vmatpush1.bf16.msra.mxu0 0
        %504 = vmatprep.subr.bf16.mxu0 0
        %505 = vmatpush1.bf16.msra.mxu0 0
        %506 = vmatprep.subr.bf16.mxu0 0
        %507 = vmatpush1.bf16.msra.mxu0 0
        %508 = vmatprep.subr.bf16.mxu0 0
        %509 = vmatpush1.bf16.msra.mxu0 0
        %510 = vmatprep.subr.bf16.mxu0 0
        %511 = vmatpush1.bf16.msra.mxu0 0
        %512 = vmatprep.subr.bf16.mxu0 0
        %513 = vmatpush1.bf16.msra.mxu0 0
        %514 = vmatprep.mubr.bf16.mxu0 0
        %515 = vmatmul.mubr.bf16.gmra.mrb[0].mxu0 %v314
        %v516 = vpop.f32.mrb[0].mxu0
        %v517 = vadd.f32 %v448, %v516
        %v518 = vpop.f32.mrb[0].mxu0
        %v519 = vpop.f32.mrb[0].mxu0
        %v520 = vadd.f32 %v445, %v519
        %v521 = vpop.f32.mrb[0].mxu0
        %522 = vdwg.mxu0
        %v523 = vadd.f32 %v517, %v454
        %v524 = vadd.f32 %v520, %v457
        %v525 = vld [vmem:[%s2] sm:$0x1]
        %v527 = vlaneseq
        %v528 = vshrl.u32 %v527, 7
        %v529 = vsub.s32 0, %v528
        %v530 = vrot.slane %v525, %v529
        %v532 = vadd.f32 %v523, %v530
        %v533 = vadd.f32 %v524, %v530
        %v534 = vmax.f32 %v532, 0.0
        %v535 = vmax.f32 %v533, 0.0
        %v536 = vpack.c.bf16 %v535, %v534
        %v537 = vld [vmem:[#allocation7] sm:$0xf]
        %v538 = vld [vmem:[#allocation7 + $0x4] sm:$0xf]
        %v539 = vld [vmem:[#allocation7 + $0x8] sm:$0xf]
        %v540 = vld [vmem:[#allocation7 + $0xc] sm:$0xf]
        %v541 = vld [vmem:[#allocation7 + $0x10] sm:$0xf]
        %v542 = vld [vmem:[#allocation7 + $0x14] sm:$0xf]
        %v543 = vld [vmem:[#allocation7 + $0x18] sm:$0xf]
        %v544 = vld [vmem:[#allocation7 + $0x1c] sm:$0xf]
        %v545 = vld [vmem:[#allocation7 + $0x20] sm:$0xf]
        %v546 = vld [vmem:[#allocation7 + $0x24] sm:$0xf]
        %v547 = vld [vmem:[#allocation7 + $0x28] sm:$0xf]
        %v548 = vld [vmem:[#allocation7 + $0x2c] sm:$0xf]
        %v549 = vld [vmem:[#allocation7 + $0x30] sm:$0xf]
        %v550 = vld [vmem:[#allocation7 + $0x34] sm:$0xf]
        %v551 = vld [vmem:[#allocation7 + $0x38] sm:$0xf]
        %v552 = vld [vmem:[#allocation7 + $0x3c] sm:$0xf]
        %v569 = vunpack.c.l.b16 %v537
        %v570 = vunpack.c.l.b16 %v538
        %v571 = vunpack.c.l.b16 %v539
        %v572 = vunpack.c.l.b16 %v540
        %v573 = vunpack.c.l.b16 %v541
        %v574 = vunpack.c.l.b16 %v542
        %v575 = vunpack.c.l.b16 %v543
        %v576 = vunpack.c.l.b16 %v544
        %v577 = vunpack.c.l.b16 %v545
        %v578 = vunpack.c.l.b16 %v546
        %v579 = vunpack.c.l.b16 %v547
        %v580 = vunpack.c.l.b16 %v548
        %v581 = vunpack.c.l.b16 %v549
        %v582 = vunpack.c.l.b16 %v550
        %v583 = vunpack.c.l.b16 %v551
        %v584 = vunpack.c.l.b16 %v552
        %v585 = vpack.c.b16 %v570, %v569
        %v586 = vpack.c.b16 %v572, %v571
        %v587 = vpack.c.b16 %v574, %v573
        %v588 = vpack.c.b16 %v576, %v575
        %v589 = vpack.c.b16 %v578, %v577
        %v590 = vpack.c.b16 %v580, %v579
        %v591 = vpack.c.b16 %v582, %v581
        %v592 = vpack.c.b16 %v584, %v583
        %601 = vmatprep.subr.bf16.mxu0 0
        %602 = vmatpush1.bf16.msra.mxu0 %v585
        %603 = vmatprep.subr.bf16.mxu0 0
        %604 = vmatpush1.bf16.msra.mxu0 %v586
        %605 = vmatprep.subr.bf16.mxu0 0
        %606 = vmatpush1.bf16.msra.mxu0 %v587
        %607 = vmatprep.subr.bf16.mxu0 0
        %608 = vmatpush1.bf16.msra.mxu0 %v588
        %609 = vmatprep.subr.bf16.mxu0 0
        %610 = vmatpush1.bf16.msra.mxu0 %v589
        %611 = vmatprep.subr.bf16.mxu0 0
        %612 = vmatpush1.bf16.msra.mxu0 %v590
        %613 = vmatprep.subr.bf16.mxu0 0
        %614 = vmatpush1.bf16.msra.mxu0 %v591
        %615 = vmatprep.subr.bf16.mxu0 0
        %616 = vmatpush1.bf16.msra.mxu0 %v592
        %617 = vmatprep.subr.bf16.mxu0 0
        %618 = vmatpush1.bf16.msra.mxu0 0
        %619 = vmatprep.subr.bf16.mxu0 0
        %620 = vmatpush1.bf16.msra.mxu0 0
        %621 = vmatprep.subr.bf16.mxu0 0
        %622 = vmatpush1.bf16.msra.mxu0 0
        %623 = vmatprep.subr.bf16.mxu0 0
        %624 = vmatpush1.bf16.msra.mxu0 0
        %625 = vmatprep.subr.bf16.mxu0 0
        %626 = vmatpush1.bf16.msra.mxu0 0
        %627 = vmatprep.subr.bf16.mxu0 0
        %628 = vmatpush1.bf16.msra.mxu0 0
        %629 = vmatprep.subr.bf16.mxu0 0
        %630 = vmatpush1.bf16.msra.mxu0 0
        %631 = vmatprep.subr.bf16.mxu0 0
        %632 = vmatpush1.bf16.msra.mxu0 0
        %633 = vmatprep.mubr.bf16.mxu0 0
        %634 = vmatmul.mubr.bf16.gmra.mrb[0].mxu0 %v536
        %v635 = vpop.f32.mrb[0].mxu0
        %v636 = vadd.f32 0.0, %v635
        %v637 = vpop.f32.mrb[0].mxu0
        %v638 = vpop.f32.mrb[0].mxu0
        %v639 = vadd.f32 0.0, %v638
        %v640 = vpop.f32.mrb[0].mxu0
        %641 = vdwg.mxu0
        %s642 = scalar_lea.vmem [#allocation7], 64
        %v643 = vld [vmem:[%s642] sm:$0xf]
        %v644 = vld [vmem:[%s642 + $0x4] sm:$0xf]
        %v645 = vld [vmem:[%s642 + $0x8] sm:$0xf]
        %v646 = vld [vmem:[%s642 + $0xc] sm:$0xf]
        %v647 = vld [vmem:[%s642 + $0x10] sm:$0xf]
        %v648 = vld [vmem:[%s642 + $0x14] sm:$0xf]
        %v649 = vld [vmem:[%s642 + $0x18] sm:$0xf]
        %v650 = vld [vmem:[%s642 + $0x1c] sm:$0xf]
        %v651 = vld [vmem:[%s642 + $0x20] sm:$0xf]
        %v652 = vld [vmem:[%s642 + $0x24] sm:$0xf]
        %v653 = vld [vmem:[%s642 + $0x28] sm:$0xf]
        %v654 = vld [vmem:[%s642 + $0x2c] sm:$0xf]
        %v655 = vld [vmem:[%s642 + $0x30] sm:$0xf]
        %v656 = vld [vmem:[%s642 + $0x34] sm:$0xf]
        %v657 = vld [vmem:[%s642 + $0x38] sm:$0xf]
        %v658 = vld [vmem:[%s642 + $0x3c] sm:$0xf]
        %s659 = scalar_lea.vmem [#allocation7], 128
        %v660 = vld [vmem:[%s659] sm:$0xf]
        %v661 = vld [vmem:[%s659 + $0x4] sm:$0xf]
        %v662 = vld [vmem:[%s659 + $0x8] sm:$0xf]
        %v663 = vld [vmem:[%s659 + $0xc] sm:$0xf]
        %v664 = vld [vmem:[%s659 + $0x10] sm:$0xf]
        %v665 = vld [vmem:[%s659 + $0x14] sm:$0xf]
        %v666 = vld [vmem:[%s659 + $0x18] sm:$0xf]
        %v667 = vld [vmem:[%s659 + $0x1c] sm:$0xf]
        %v668 = vld [vmem:[%s659 + $0x20] sm:$0xf]
        %v669 = vld [vmem:[%s659 + $0x24] sm:$0xf]
        %v670 = vld [vmem:[%s659 + $0x28] sm:$0xf]
        %v671 = vld [vmem:[%s659 + $0x2c] sm:$0xf]
        %v672 = vld [vmem:[%s659 + $0x30] sm:$0xf]
        %v673 = vld [vmem:[%s659 + $0x34] sm:$0xf]
        %v674 = vld [vmem:[%s659 + $0x38] sm:$0xf]
        %v675 = vld [vmem:[%s659 + $0x3c] sm:$0xf]
        %v692 = vunpack.c.l.b16 %v660
        %v693 = vunpack.c.l.b16 %v661
        %v694 = vunpack.c.l.b16 %v662
        %v695 = vunpack.c.l.b16 %v663
        %v696 = vunpack.c.l.b16 %v664
        %v697 = vunpack.c.l.b16 %v665
        %v698 = vunpack.c.l.b16 %v666
        %v699 = vunpack.c.l.b16 %v667
        %v700 = vunpack.c.l.b16 %v668
        %v701 = vunpack.c.l.b16 %v669
        %v702 = vunpack.c.l.b16 %v670
        %v703 = vunpack.c.l.b16 %v671
        %v704 = vunpack.c.l.b16 %v672
        %v705 = vunpack.c.l.b16 %v673
        %v706 = vunpack.c.l.b16 %v674
        %v707 = vunpack.c.l.b16 %v675
        %v708 = vpack.c.b16 %v693, %v692
        %v709 = vpack.c.b16 %v695, %v694
        %v710 = vpack.c.b16 %v697, %v696
        %v711 = vpack.c.b16 %v699, %v698
        %v712 = vpack.c.b16 %v701, %v700
        %v713 = vpack.c.b16 %v703, %v702
        %v714 = vpack.c.b16 %v705, %v704
        %v715 = vpack.c.b16 %v707, %v706
        %724 = vmatprep.subr.bf16.mxu0 0
        %725 = vmatpush1.bf16.msra.mxu0 %v708
        %726 = vmatprep.subr.bf16.mxu0 0
        %727 = vmatpush1.bf16.msra.mxu0 %v709
        %728 = vmatprep.subr.bf16.mxu0 0
        %729 = vmatpush1.bf16.msra.mxu0 %v710
        %730 = vmatprep.subr.bf16.mxu0 0
        %731 = vmatpush1.bf16.msra.mxu0 %v711
        %732 = vmatprep.subr.bf16.mxu0 0
        %733 = vmatpush1.bf16.msra.mxu0 %v712
        %734 = vmatprep.subr.bf16.mxu0 0
        %735 = vmatpush1.bf16.msra.mxu0 %v713
        %736 = vmatprep.subr.bf16.mxu0 0
        %737 = vmatpush1.bf16.msra.mxu0 %v714
        %738 = vmatprep.subr.bf16.mxu0 0
        %739 = vmatpush1.bf16.msra.mxu0 %v715
        %740 = vmatprep.subr.bf16.mxu0 0
        %741 = vmatpush1.bf16.msra.mxu0 0
        %742 = vmatprep.subr.bf16.mxu0 0
        %743 = vmatpush1.bf16.msra.mxu0 0
        %744 = vmatprep.subr.bf16.mxu0 0
        %745 = vmatpush1.bf16.msra.mxu0 0
        %746 = vmatprep.subr.bf16.mxu0 0
        %747 = vmatpush1.bf16.msra.mxu0 0
        %748 = vmatprep.subr.bf16.mxu0 0
        %749 = vmatpush1.bf16.msra.mxu0 0
        %750 = vmatprep.subr.bf16.mxu0 0
        %751 = vmatpush1.bf16.msra.mxu0 0
        %752 = vmatprep.subr.bf16.mxu0 0
        %753 = vmatpush1.bf16.msra.mxu0 0
        %754 = vmatprep.subr.bf16.mxu0 0
        %755 = vmatpush1.bf16.msra.mxu0 0
        %756 = vmatprep.mubr.bf16.mxu0 0
        %757 = vmatmul.mubr.bf16.gmra.mrb[0].mxu0 %v536
        %v758 = vpop.f32.mrb[0].mxu0
        %v759 = vadd.f32 0.0, %v758
        %v760 = vpop.f32.mrb[0].mxu0
        %v761 = vpop.f32.mrb[0].mxu0
        %v762 = vadd.f32 0.0, %v761
        %v763 = vpop.f32.mrb[0].mxu0
        %764 = vdwg.mxu0
        %v767 = vrot.slane %v636, 7
        %v768 = vrot.slane %v639, 7
        %v769 = vsel %vm442, %v767, %v768
        %v772 = vsel %vm442, 0.0, %v767
        %v775 = vrot.slane %v759, 1
        %v776 = vrot.slane %v762, 1
        %v777 = vsel %vm451, %v775, %v776
        %v780 = vsel %vm451, %v776, 0.0
        %v797 = vunpack.c.l.b16 %v643
        %v798 = vunpack.c.l.b16 %v644
        %v799 = vunpack.c.l.b16 %v645
        %v800 = vunpack.c.l.b16 %v646
        %v801 = vunpack.c.l.b16 %v647
        %v802 = vunpack.c.l.b16 %v648
        %v803 = vunpack.c.l.b16 %v649
        %v804 = vunpack.c.l.b16 %v650
        %v805 = vunpack.c.l.b16 %v651
        %v806 = vunpack.c.l.b16 %v652
        %v807 = vunpack.c.l.b16 %v653
        %v808 = vunpack.c.l.b16 %v654
        %v809 = vunpack.c.l.b16 %v655
        %v810 = vunpack.c.l.b16 %v656
        %v811 = vunpack.c.l.b16 %v657
        %v812 = vunpack.c.l.b16 %v658
        %v813 = vpack.c.b16 %v798, %v797
        %v814 = vpack.c.b16 %v800, %v799
        %v815 = vpack.c.b16 %v802, %v801
        %v816 = vpack.c.b16 %v804, %v803
        %v817 = vpack.c.b16 %v806, %v805
        %v818 = vpack.c.b16 %v808, %v807
        %v819 = vpack.c.b16 %v810, %v809
        %v820 = vpack.c.b16 %v812, %v811
        %829 = vmatprep.subr.bf16.mxu0 0
        %830 = vmatpush1.bf16.msra.mxu0 %v813
        %831 = vmatprep.subr.bf16.mxu0 0
        %832 = vmatpush1.bf16.msra.mxu0 %v814
        %833 = vmatprep.subr.bf16.mxu0 0
        %834 = vmatpush1.bf16.msra.mxu0 %v815
        %835 = vmatprep.subr.bf16.mxu0 0
        %836 = vmatpush1.bf16.msra.mxu0 %v816
        %837 = vmatprep.subr.bf16.mxu0 0
        %838 = vmatpush1.bf16.msra.mxu0 %v817
        %839 = vmatprep.subr.bf16.mxu0 0
        %840 = vmatpush1.bf16.msra.mxu0 %v818
        %841 = vmatprep.subr.bf16.mxu0 0
        %842 = vmatpush1.bf16.msra.mxu0 %v819
        %843 = vmatprep.subr.bf16.mxu0 0
        %844 = vmatpush1.bf16.msra.mxu0 %v820
        %845 = vmatprep.subr.bf16.mxu0 0
        %846 = vmatpush1.bf16.msra.mxu0 0
        %847 = vmatprep.subr.bf16.mxu0 0
        %848 = vmatpush1.bf16.msra.mxu0 0
        %849 = vmatprep.subr.bf16.mxu0 0
        %850 = vmatpush1.bf16.msra.mxu0 0
        %851 = vmatprep.subr.bf16.mxu0 0
        %852 = vmatpush1.bf16.msra.mxu0 0
        %853 = vmatprep.subr.bf16.mxu0 0
        %854 = vmatpush1.bf16.msra.mxu0 0
        %855 = vmatprep.subr.bf16.mxu0 0
        %856 = vmatpush1.bf16.msra.mxu0 0
        %857 = vmatprep.subr.bf16.mxu0 0
        %858 = vmatpush1.bf16.msra.mxu0 0
        %859 = vmatprep.subr.bf16.mxu0 0
        %860 = vmatpush1.bf16.msra.mxu0 0
        %861 = vmatprep.mubr.bf16.mxu0 0
        %862 = vmatmul.mubr.bf16.gmra.mrb[0].mxu0 %v536
        %v863 = vpop.f32.mrb[0].mxu0
        %v864 = vadd.f32 %v772, %v863
        %v865 = vpop.f32.mrb[0].mxu0
        %v866 = vpop.f32.mrb[0].mxu0
        %v867 = vadd.f32 %v769, %v866
        %v868 = vpop.f32.mrb[0].mxu0
        %869 = vdwg.mxu0
        %v870 = vadd.f32 %v864, %v777
        %v871 = vadd.f32 %v867, %v780
        %v872 = vld [vmem:[%s4] sm:$0x1]
        %v874 = vlaneseq
        %v875 = vshrl.u32 %v874, 7
        %v876 = vsub.s32 0, %v875
        %v877 = vrot.slane %v872, %v876
        %v879 = vadd.f32 %v870, %v877
        %v880 = vadd.f32 %v871, %v877
        %v881 = vmax.f32 %v879, 0.0
        %v882 = vmax.f32 %v880, 0.0
        %883 = vst [vmem:[%s271] sm:$0xff] %v881
        %884 = vst [vmem:[%s271 + $0x8] sm:$0xff] %v882
        %s885 = sand.u32 %s141, 1
        %s886 = scalar_lea.sflag [#allocation4], %s885
        %s887 = sand.u32 %s141, 1
        %s888 = smul.addr %s887, 16
        %s889 = scalar_lea.vmem [#allocation8], %s888
        // Predicated region
        $region53: #{tpu_custom_call.1} parent=39 // pred_check
          %p890 = pneg %p151
        $region54: #{tpu_custom_call.1} parent=39 // pred_check_branch
          %892 = sbr.rel (%p890) target = $region56
        $region55: #{tpu_custom_call.1} parent=39 // pred_region
          %s894 = ssub.s32 256, 256
          %895 = vsyncadd %s886, %s894
          %s896 = smul.addr %s23, 2
          %s897 = smul.addr %s896, 128
          %s898 = scalar_lea.hbm %s5, %s897
          %s899 = sshll.u32 %s889, 4
          %s900 = int_to_ptr.vmem [resolvable:$true] %s899
          %905 = dma.vmem_to_hbm [thread:$0]  %s900, 256, %s898, %s886, 128, 128, 8
        $region56: #{tpu_custom_call.1} parent=39 // pred_fallthru
          _
      $region40: #{tpu_custom_call.1} parent=5 // pred_fallthru
        _
      %p906 = scmp.le.s32.totalorder 2, %s18
      // Predicated region
      $region57: #{tpu_custom_call.1} parent=5 // pred_check
        %p907 = pneg %p906
      $region58: #{tpu_custom_call.1} parent=5 // pred_check_branch
        %909 = sbr.rel (%p907) target = $region60
      $region59: #{tpu_custom_call.1} parent=5 // pred_region
        %s910 = ssub.s32 %s18, 2
        // Predicated region
        $region61: #{tpu_custom_call.1} parent=59 // pred_check
          %p911 = pneg %p157
        $region62: #{tpu_custom_call.1} parent=59 // pred_check_branch
          %913 = sbr.rel (%p911) target = $region64
        $region63: #{tpu_custom_call.1} parent=59 // pred_region
          %s914 = sand.u32 %s142, 1
          %s915 = scalar_lea.sflag [#allocation4], %s914
          %s916 = sand.u32 %s142, 1
          %s917 = smul.addr %s916, 16
          %s918 = scalar_lea.vmem [#allocation8], %s917
          %919 = dma.done %s915, 256
        $region64: #{tpu_custom_call.1} parent=59 // pred_fallthru
          _
      $region60: #{tpu_custom_call.1} parent=5 // pred_fallthru
        _
    $region6: #{tpu_custom_call.1} parent=1 // loop_footer
      %s22 = sadd.s32 1, %s18
    $region7: #{tpu_custom_call.1} parent=1 // loop_footer_branch
      %17 = sbr.rel target = $region3
    $region8: #{tpu_custom_call.1} parent=1 // loop_exit
      _
    %920 = vsyncpa [#allocation3], 1
    %s921 = scalar_lea.sflag [#allocation3], 1
    %922 = vsyncpa %s921, 1
    %923 = vsyncpa [#allocation6], 1
    %924 = vsyncpa [#allocation4], 1
    %s925 = scalar_lea.sflag [#allocation4], 1
    %926 = vsyncpa %s925, 1

</llo_original>
